<compile_context>
chip_gen: v7x
topology: tpu7x:2x2x1
jax: 0.10.0
libtpu: 0.0.40
codegen_flags: <defaults>
</compile_context>

<pallas_src>
import jax
import jax.numpy as jnp
from jax.experimental import pallas as pl
from jax.experimental.pallas import tpu as pltpu


C_PAD = 128   # lane-dense padded classifier output width


def gcn_kernel(a_ref, x_ref,
               w1_ref, b1_ref,
               w2_ref, b2_ref,
               wc_ref, bc_ref,
               out_ref):
    """One grid step = one graph. Blocks: a (1,N,N) bf16, x (1,N,in) bf16,
    weights bf16 (resident, constant index map), biases f32, out (1,1,128) f32."""
    a = a_ref[0]                        # (N, N)   bf16, normalized adjacency
    x = x_ref[0]                        # (N, in)  bf16

    # --- GraphConv 1: aggregate-first (in_feats <= out_feats, DGL order) ---
    #     relu((A @ X) @ W1 + b1)
    ax = jnp.dot(a, x, preferred_element_type=jnp.float32)              # (N, in) f32
    h = jnp.dot(ax.astype(jnp.bfloat16), w1_ref[...],
                preferred_element_type=jnp.float32)                     # (N, H1) f32
    h = jnp.maximum(h + b1_ref[...], 0.0)

    # --- GraphConv 2: aggregate-first:  relu((A @ H) @ W2 + b2) ---
    ah = jnp.dot(a, h.astype(jnp.bfloat16), preferred_element_type=jnp.float32)
    h2 = jnp.dot(ah.astype(jnp.bfloat16), w2_ref[...],
                 preferred_element_type=jnp.float32)                    # (N, H2) f32
    h2 = jnp.maximum(h2 + b2_ref[...], 0.0)

    # --- dgl.mean_nodes: mean over the node axis of this graph ---
    n_nodes = h2.shape[0]
    hg = jnp.sum(h2, axis=0, keepdims=True) * (1.0 / n_nodes)           # (1, H2) f32

    # --- fused classifier (3 Linears folded into one matmul, padded to 128 lanes) ---
    z = jnp.dot(hg.astype(jnp.bfloat16), wc_ref[...],
                preferred_element_type=jnp.float32) + bc_ref[...]       # (1, 128) f32

    out_ref[0] = z.astype(out_ref.dtype)


def gcn_forward(a_norm, x, params, n_classes):
    """Batched forward: a_norm (B,N,N), x (B,N,in) -> (B, n_classes)."""
    B, N, _ = a_norm.shape
    in_dim = x.shape[-1]
    w1, b1, w2, b2, wc1, bc1, wc2, bc2, wc3, bc3 = params
    h1 = w1.shape[1]
    h2 = w2.shape[1]

    # Fuse the activation-free classifier offline (plain JAX, once).
    #   ((hg@W1+b1)@W2+b2)@W3+b3 = hg@(W1@W2@W3) + ((b1@W2+b2)@W3+b3)
    wc = wc1 @ wc2 @ wc3                                   # (h2, n_classes)
    bc = (bc1 @ wc2 + bc2) @ wc3 + bc3                     # (1, n_classes)

    # Pad classifier output to a lane-dense 128-wide slab (unmasked stores).
    wc_pad = jnp.zeros((h2, C_PAD), jnp.float32).at[:, :n_classes].set(wc)
    bc_pad = jnp.zeros((1, C_PAD), jnp.float32).at[:, :n_classes].set(bc)

    # bf16 MXU operands (f32 accumulation happens inside the kernel).
    a_bf = a_norm.astype(jnp.bfloat16)
    x_bf = x.astype(jnp.bfloat16)
    w1_bf = w1.astype(jnp.bfloat16)
    w2_bf = w2.astype(jnp.bfloat16)
    wc_bf = wc_pad.astype(jnp.bfloat16)

    out = pl.pallas_call(
        gcn_kernel,
        out_shape=jax.ShapeDtypeStruct((B, 1, C_PAD), jnp.float32),
        grid_spec=pltpu.PrefetchScalarGridSpec(
            num_scalar_prefetch=0,
            grid=(B,),
            in_specs=[
                pl.BlockSpec((1, N, N), lambda b: (b, 0, 0)),        # A (per graph)
                pl.BlockSpec((1, N, in_dim), lambda b: (b, 0, 0)),   # X (per graph)
                pl.BlockSpec((in_dim, h1), lambda b: (0, 0)),        # W1 (resident)
                pl.BlockSpec((1, h1), lambda b: (0, 0)),             # b1
                pl.BlockSpec((h1, h2), lambda b: (0, 0)),            # W2
                pl.BlockSpec((1, h2), lambda b: (0, 0)),             # b2
                pl.BlockSpec((h2, C_PAD), lambda b: (0, 0)),         # fused Wc (padded)
                pl.BlockSpec((1, C_PAD), lambda b: (0, 0)),          # fused bc (padded)
            ],
            out_specs=pl.BlockSpec((1, 1, C_PAD), lambda b: (b, 0, 0)),
        ),
        compiler_params=pltpu.CompilerParams(
            # graph axis is independent -> shards across both TCs on v7x,
            # harmless on v5e/v6e (single TC).
            dimension_semantics=("parallel",),
        ),
    )(a_bf, x_bf, w1_bf, b1, w2_bf, b2, wc_bf, bc_pad)

    return out[:, 0, :n_classes]                           # (B, n_classes)


def make_params(key, in_dim, hidden_dim, hidden_dim2, n_classes):
    """Deterministic synthetic parameters matching the PyTorch module shapes.

    DGL GraphConv weights are (in_feats, out_feats); nn.Linear weights are stored
    here already transposed to (in, out) so the math is `x @ W + b`.
    """
    ks = jax.random.split(key, 10)
    scale = 0.1
    w1  = scale * jax.random.normal(ks[0], (in_dim, hidden_dim),      jnp.float32)
    b1  = scale * jax.random.normal(ks[1], (1, hidden_dim),           jnp.float32)
    w2  = scale * jax.random.normal(ks[2], (hidden_dim, hidden_dim2), jnp.float32)
    b2  = scale * jax.random.normal(ks[3], (1, hidden_dim2),          jnp.float32)
    wc1 = scale * jax.random.normal(ks[4], (hidden_dim2, 12),         jnp.float32)
    bc1 = scale * jax.random.normal(ks[5], (1, 12),                   jnp.float32)
    wc2 = scale * jax.random.normal(ks[6], (12, 12),                  jnp.float32)
    bc2 = scale * jax.random.normal(ks[7], (1, 12),                   jnp.float32)
    wc3 = scale * jax.random.normal(ks[8], (12, n_classes),           jnp.float32)
    bc3 = scale * jax.random.normal(ks[9], (1, n_classes),            jnp.float32)
    return (w1, b1, w2, b2, wc1, bc1, wc2, bc2, wc3, bc3)


def make_graphs(key, batch, n_nodes):
    """Batch of random symmetric graphs (no self-loops), normalized as
    D^-1/2 A D^-1/2 (DGL GraphConv norm='both'; zero-degree nodes get norm 0)."""
    upper = jax.random.bernoulli(key, p=0.15,
                                 shape=(batch, n_nodes, n_nodes)).astype(jnp.float32)
    upper = jnp.triu(upper, k=1)
    a = upper + jnp.swapaxes(upper, -1, -2)                # symmetric, zero diagonal
    deg = jnp.sum(a, axis=-1)
    inv_sqrt = jnp.where(deg > 0, jax.lax.rsqrt(jnp.maximum(deg, 1.0)), 0.0)
    a_norm = inv_sqrt[..., :, None] * a * inv_sqrt[..., None, :]
    return a_norm


def ref_forward(a_norm, x, params):
    """Plain-JAX f32 reference with the original (unfused) 3-layer classifier."""
    w1, b1, w2, b2, wc1, bc1, wc2, bc2, wc3, bc3 = params
    h = jnp.maximum(jnp.einsum('bij,bjf->bif', a_norm, x) @ w1 + b1, 0.0)
    h = jnp.maximum(jnp.einsum('bij,bjf->bif', a_norm, h) @ w2 + b2, 0.0)
    hg = jnp.mean(h, axis=1)                               # (B, hidden2)
    return ((hg @ wc1 + bc1) @ wc2 + bc2) @ wc3 + bc3      # (B, n_classes)


if __name__ == "__main__":
    # Small shapes consistent with the module's forward pass.
    BATCH     = 8     # graphs per call (grid axis)
    N_NODES   = 64    # nodes per graph
    IN_DIM    = 16
    HIDDEN    = 32
    HIDDEN2   = 32
    N_CLASSES = 4

    key = jax.random.PRNGKey(0)
    k_graph, k_feat, k_param = jax.random.split(key, 3)

    a_norm = make_graphs(k_graph, BATCH, N_NODES)                              # (B, N, N)
    x = jax.random.normal(k_feat, (BATCH, N_NODES, IN_DIM), jnp.float32)       # (B, N, in)
    params = make_params(k_param, IN_DIM, HIDDEN, HIDDEN2, N_CLASSES)

    out = gcn_forward(a_norm, x, params, N_CLASSES)
    out = jax.block_until_ready(out)

    # f32 reference; tolerance loosened because the kernel feeds bf16 to the MXU.
    ref = ref_forward(a_norm, x, params)
    assert out.shape == (BATCH, N_CLASSES)
    assert jnp.allclose(out, ref, atol=3e-2, rtol=3e-2)

    print("KERNEL_OK")
</pallas_src>

<mosaic_0001>
module attributes {stable_mosaic.version = 11 : i64} {
  func.func @gcn_kernel(%arg0: i32, %arg1: memref<1x64x64xbf16, #tpu.memory_space<vmem>>, %arg2: memref<1x64x16xbf16, #tpu.memory_space<vmem>>, %arg3: memref<16x32xbf16, #tpu.memory_space<vmem>>, %arg4: memref<1x32xf32, #tpu.memory_space<vmem>>, %arg5: memref<32x32xbf16, #tpu.memory_space<vmem>>, %arg6: memref<1x32xf32, #tpu.memory_space<vmem>>, %arg7: memref<32x128xbf16, #tpu.memory_space<vmem>>, %arg8: memref<1x128xf32, #tpu.memory_space<vmem>>, %arg9: memref<1x1x128xf32, #tpu.memory_space<vmem>>) attributes {dimension_semantics = [#tpu.dimension_semantics<parallel>], iteration_bounds = array<i64: 8>, scalar_prefetch = 0 : i64, scratch_operands = 0 : i64, tpu.core_type = #tpu.core_type<tc>, window_params = [{transform_indices = @transform_0, window_bounds = array<i64: 1, 64, 64>}, {transform_indices = @transform_1, window_bounds = array<i64: 1, 64, 16>}, {pipeline_mode = #tpu.pipeline_mode<synchronous>, transform_indices = @transform_2, window_bounds = array<i64: 16, 32>}, {pipeline_mode = #tpu.pipeline_mode<synchronous>, transform_indices = @transform_3, window_bounds = array<i64: 1, 32>}, {pipeline_mode = #tpu.pipeline_mode<synchronous>, transform_indices = @transform_4, window_bounds = array<i64: 32, 32>}, {pipeline_mode = #tpu.pipeline_mode<synchronous>, transform_indices = @transform_5, window_bounds = array<i64: 1, 32>}, {pipeline_mode = #tpu.pipeline_mode<synchronous>, transform_indices = @transform_6, window_bounds = array<i64: 32, 128>}, {pipeline_mode = #tpu.pipeline_mode<synchronous>, transform_indices = @transform_7, window_bounds = array<i64: 1, 128>}, {transform_indices = @transform_8, window_bounds = array<i64: 1, 1, 128>}]} {
    %c0 = arith.constant 0 : index
    %c0_0 = arith.constant 0 : index
    %c0_1 = arith.constant 0 : index
    %0 = vector.load %arg1[%c0, %c0_0, %c0_1] : memref<1x64x64xbf16, #tpu.memory_space<vmem>>, vector<1x64x64xbf16>
    %1 = vector.shape_cast %0 : vector<1x64x64xbf16> to vector<64x64xbf16>
    %c0_2 = arith.constant 0 : index
    %c0_3 = arith.constant 0 : index
    %c0_4 = arith.constant 0 : index
    %2 = vector.load %arg2[%c0_2, %c0_3, %c0_4] : memref<1x64x16xbf16, #tpu.memory_space<vmem>>, vector<1x64x16xbf16>
    %3 = vector.shape_cast %2 : vector<1x64x16xbf16> to vector<64x16xbf16>
    %cst = arith.constant dense<0.000000e+00> : vector<64x16xf32>
    %4 = tpu.matmul %1, %3, %cst {dimension_numbers = #tpu.dot_dimension_numbers<[1], [0], [0], [1], [0, 0, 1, 1], [], []>} : vector<64x64xbf16>, vector<64x16xbf16>, vector<64x16xf32> -> vector<64x16xf32>
    %5 = arith.truncf %4 : vector<64x16xf32> to vector<64x16xbf16>
    %c0_5 = arith.constant 0 : index
    %c0_6 = arith.constant 0 : index
    %6 = vector.load %arg3[%c0_5, %c0_6] : memref<16x32xbf16, #tpu.memory_space<vmem>>, vector<16x32xbf16>
    %cst_7 = arith.constant dense<0.000000e+00> : vector<64x32xf32>
    %7 = tpu.matmul %5, %6, %cst_7 {dimension_numbers = #tpu.dot_dimension_numbers<[1], [0], [0], [1], [0, 0, 1, 1], [], []>} : vector<64x16xbf16>, vector<16x32xbf16>, vector<64x32xf32> -> vector<64x32xf32>
    %c0_8 = arith.constant 0 : index
    %c0_9 = arith.constant 0 : index
    %8 = vector.load %arg4[%c0_8, %c0_9] : memref<1x32xf32, #tpu.memory_space<vmem>>, vector<1x32xf32>
    %9 = vector.broadcast %8 : vector<1x32xf32> to vector<64x32xf32>
    %10 = arith.addf %7, %9 : vector<64x32xf32>
    %cst_10 = arith.constant 0.000000e+00 : f32
    %11 = vector.broadcast %cst_10 : f32 to vector<64x32xf32>
    %12 = arith.maximumf %10, %11 : vector<64x32xf32>
    %13 = arith.truncf %12 : vector<64x32xf32> to vector<64x32xbf16>
    %cst_11 = arith.constant dense<0.000000e+00> : vector<64x32xf32>
    %14 = tpu.matmul %1, %13, %cst_11 {dimension_numbers = #tpu.dot_dimension_numbers<[1], [0], [0], [1], [0, 0, 1, 1], [], []>} : vector<64x64xbf16>, vector<64x32xbf16>, vector<64x32xf32> -> vector<64x32xf32>
    %15 = arith.truncf %14 : vector<64x32xf32> to vector<64x32xbf16>
    %c0_12 = arith.constant 0 : index
    %c0_13 = arith.constant 0 : index
    %16 = vector.load %arg5[%c0_12, %c0_13] : memref<32x32xbf16, #tpu.memory_space<vmem>>, vector<32x32xbf16>
    %cst_14 = arith.constant dense<0.000000e+00> : vector<64x32xf32>
    %17 = tpu.matmul %15, %16, %cst_14 {dimension_numbers = #tpu.dot_dimension_numbers<[1], [0], [0], [1], [0, 0, 1, 1], [], []>} : vector<64x32xbf16>, vector<32x32xbf16>, vector<64x32xf32> -> vector<64x32xf32>
    %c0_15 = arith.constant 0 : index
    %c0_16 = arith.constant 0 : index
    %18 = vector.load %arg6[%c0_15, %c0_16] : memref<1x32xf32, #tpu.memory_space<vmem>>, vector<1x32xf32>
    %19 = vector.broadcast %18 : vector<1x32xf32> to vector<64x32xf32>
    %20 = arith.addf %17, %19 : vector<64x32xf32>
    %cst_17 = arith.constant 0.000000e+00 : f32
    %21 = vector.broadcast %cst_17 : f32 to vector<64x32xf32>
    %22 = arith.maximumf %20, %21 : vector<64x32xf32>
    %cst_18 = arith.constant dense<0.000000e+00> : vector<32xf32>
    %23 = vector.multi_reduction <add>, %22, %cst_18 [0] : vector<64x32xf32> to vector<32xf32>
    %24 = vector.shape_cast %23 : vector<32xf32> to vector<1x32xf32>
    %cst_19 = arith.constant 1.562500e-02 : f32
    %25 = vector.broadcast %cst_19 : f32 to vector<1x32xf32>
    %26 = arith.mulf %24, %25 : vector<1x32xf32>
    %27 = arith.truncf %26 : vector<1x32xf32> to vector<1x32xbf16>
    %c0_20 = arith.constant 0 : index
    %c0_21 = arith.constant 0 : index
    %28 = vector.load %arg7[%c0_20, %c0_21] : memref<32x128xbf16, #tpu.memory_space<vmem>>, vector<32x128xbf16>
    %cst_22 = arith.constant dense<0.000000e+00> : vector<1x128xf32>
    %29 = tpu.matmul %27, %28, %cst_22 {dimension_numbers = #tpu.dot_dimension_numbers<[1], [0], [0], [1], [0, 0, 1, 1], [], []>} : vector<1x32xbf16>, vector<32x128xbf16>, vector<1x128xf32> -> vector<1x128xf32>
    %c0_23 = arith.constant 0 : index
    %c0_24 = arith.constant 0 : index
    %30 = vector.load %arg8[%c0_23, %c0_24] : memref<1x128xf32, #tpu.memory_space<vmem>>, vector<1x128xf32>
    %31 = arith.addf %29, %30 : vector<1x128xf32>
    %c0_25 = arith.constant 0 : index
    %c0_26 = arith.constant 0 : index
    %c0_27 = arith.constant 0 : index
    %32 = vector.load %arg9[%c0_25, %c0_26, %c0_27] : memref<1x1x128xf32, #tpu.memory_space<vmem>>, vector<1x1x128xf32>
    %33 = vector.shape_cast %32 : vector<1x1x128xf32> to vector<1x128xf32>
    %34 = vector.shape_cast %31 : vector<1x128xf32> to vector<1x1x128xf32>
    tpu.vector_store %arg9[%c0_25, %c0_26, %c0_27], %34 {strides = array<i32>} : memref<1x1x128xf32, #tpu.memory_space<vmem>>, vector<1x1x128xf32>,
    return
  }
  func.func @transform_0(%arg0: i32) -> (i32, i32, i32) {
    %c0_i32 = arith.constant 0 : i32
    %c0_i32_0 = arith.constant 0 : i32
    %c0_i32_1 = arith.constant 0 : i32
    return %arg0, %c0_i32, %c0_i32_0 : i32, i32, i32
  }
  func.func @transform_1(%arg0: i32) -> (i32, i32, i32) {
    %c0_i32 = arith.constant 0 : i32
    %c0_i32_0 = arith.constant 0 : i32
    %c0_i32_1 = arith.constant 0 : i32
    return %arg0, %c0_i32, %c0_i32_0 : i32, i32, i32
  }
  func.func @transform_2(%arg0: i32) -> (i32, i32) {
    %c0_i32 = arith.constant 0 : i32
    %c0_i32_0 = arith.constant 0 : i32
    %c0_i32_1 = arith.constant 0 : i32
    return %c0_i32, %c0_i32_0 : i32, i32
  }
  func.func @transform_3(%arg0: i32) -> (i32, i32) {
    %c0_i32 = arith.constant 0 : i32
    %c0_i32_0 = arith.constant 0 : i32
    %c0_i32_1 = arith.constant 0 : i32
    return %c0_i32, %c0_i32_0 : i32, i32
  }
  func.func @transform_4(%arg0: i32) -> (i32, i32) {
    %c0_i32 = arith.constant 0 : i32
    %c0_i32_0 = arith.constant 0 : i32
    %c0_i32_1 = arith.constant 0 : i32
    return %c0_i32, %c0_i32_0 : i32, i32
  }
  func.func @transform_5(%arg0: i32) -> (i32, i32) {
    %c0_i32 = arith.constant 0 : i32
    %c0_i32_0 = arith.constant 0 : i32
    %c0_i32_1 = arith.constant 0 : i32
    return %c0_i32, %c0_i32_0 : i32, i32
  }
  func.func @transform_6(%arg0: i32) -> (i32, i32) {
    %c0_i32 = arith.constant 0 : i32
    %c0_i32_0 = arith.constant 0 : i32
    %c0_i32_1 = arith.constant 0 : i32
    return %c0_i32, %c0_i32_0 : i32, i32
  }
  func.func @transform_7(%arg0: i32) -> (i32, i32) {
    %c0_i32 = arith.constant 0 : i32
    %c0_i32_0 = arith.constant 0 : i32
    %c0_i32_1 = arith.constant 0 : i32
    return %c0_i32, %c0_i32_0 : i32, i32
  }
  func.func @transform_8(%arg0: i32) -> (i32, i32, i32) {
    %c0_i32 = arith.constant 0 : i32
    %c0_i32_0 = arith.constant 0 : i32
    %c0_i32_1 = arith.constant 0 : i32
    return %arg0, %c0_i32, %c0_i32_0 : i32, i32, i32
  }
}

</mosaic_0001>

<llo_original>
// kernel: tpu_custom_call.1
$region0: #{tpu_custom_call.1}
  #allocation0 [shape = 'u32[]', space=smem, size = 0x4, offset = 0x4, fixed_abs, tag = 'smem constant byte address 0x4 - core index']
  #allocation1 [shape = 'u32[144,128]{1,0:T(1,128)}', space=vmem, size = 0x12000, scoped, tag = 'internal scratch']
  %s0 = inlined_call_operand.vmem [shape: bf16[8,64,64], index: 0, kind: input, shape index: {}]
  %s1 = inlined_call_operand.vmem [shape: bf16[8,64,16], index: 1, kind: input, shape index: {}]
  %s2 = inlined_call_operand.vmem [shape: bf16[16,32], index: 2, kind: input, shape index: {}]
  %s3 = inlined_call_operand.vmem [shape: f32[1,32], index: 3, kind: input, shape index: {}]
  %s4 = inlined_call_operand.vmem [shape: bf16[32,32], index: 4, kind: input, shape index: {}]
  %s5 = inlined_call_operand.vmem [shape: f32[1,32], index: 5, kind: input, shape index: {}]
  %s6 = inlined_call_operand.vmem [shape: bf16[32,128], index: 6, kind: input, shape index: {}]
  %s7 = inlined_call_operand.vmem [shape: f32[1,128], index: 7, kind: input, shape index: {}]
  %s8 = inlined_call_operand.hbm [shape: f32[8,1,128], index: 8, kind: output, shape index: {}]
  %s9 = sld [smem:[#allocation0]]
  $region65: #{tpu_custom_call.1} parent=0
    _
  %s11 = ssub.s32 1, %s9
  %s12 = scalar_select 0, %s11, %s9
  $region1: #{tpu_custom_call.1} parent=0
    #allocation2 [shape = 'u8[1024]{0}', space=vmem, size = 0x400, scoped, tag = 'output window, operand 0']
    #allocation3 [shape = 's32[2]{0}', space=sflag, size = 0x8, scoped, tag = 'scoped memory for tpu_custom_call.1']
    %13 = vsyncpa [#allocation3], 0
    %s14 = scalar_lea.sflag [#allocation3], 1
    %15 = vsyncpa %s14, 0
    loop: start=0, step=1, limit=10
    $region2: #{tpu_custom_call.1} parent=1 // loop_pre_header
      _
    $region3: #{tpu_custom_call.1} parent=1 // loop_header
      %s17 = sphi 0, %s21
      %p18 = scmp.ge.s32.totalorder %s17, 10
      %s27 = sphi 0, %s29
      %s30 = sphi 0, %s27
      %s31 = sphi 0, %s30
      %s47 = sphi 0, %s31
      %s53 = sphi 0, %s55
      %s56 = sphi 0, %s53
      %s57 = sphi 0, %s56
      %s73 = sphi 0, %s57
      %s77 = sphi 0, %s77
      %s79 = sphi 0, %s77
      %s80 = sphi 0, %s79
      %s94 = sphi 0, %s80
      %s98 = sphi 0, %s98
      %s100 = sphi 0, %s98
      %s101 = sphi 0, %s100
      %s115 = sphi 0, %s101
      %s119 = sphi 0, %s119
      %s121 = sphi 0, %s119
      %s122 = sphi 0, %s121
      %s136 = sphi 0, %s122
      %s140 = sphi 0, %s140
      %s142 = sphi 0, %s140
      %s143 = sphi 0, %s142
      %s157 = sphi 0, %s143
      %s161 = sphi 0, %s161
      %s163 = sphi 0, %s161
      %s164 = sphi 0, %s163
      %s178 = sphi 0, %s164
      %s182 = sphi 0, %s182
      %s184 = sphi 0, %s182
      %s185 = sphi 0, %s184
      %s199 = sphi 0, %s185
      %s205 = sphi 0, %s207
      %s208 = sphi 0, %s205
      %s209 = sphi 0, %s208
      %s225 = sphi 0, %s209
    $region4: #{tpu_custom_call.1} parent=1 // loop_header_branch
      %20 = sbr.rel (%p18) target = $region8
    $region5: #{tpu_custom_call.1} parent=1 // loop_body
      %s22 = ssub.s32 %s17, 1
      %s23 = ssub.s32 %s17, 2
      %s24 = sadd.s32 %s17, 1
      %s25 = ssub.s32 %s17, %s24
      %p26 = scmp.eq.s32.totalorder %s25, 0
      %s28 = sadd.s32 %s27, 1
      %s29 = scalar_select %p26, %s27, %s28
      %p32 = pneg %p26
      %p33 = scmp.eq.s32.totalorder %s17, 7
      %p34 = por %p32, %p33
      %p35 = scmp.ne.s32.totalorder %s27, %s30
      %p36 = scmp.eq.s32.totalorder %s17, 0
      %p37 = por %p35, %p36
      %p38 = scmp.ne.s32.totalorder %s27, %s30
      %p39 = scmp.eq.s32.totalorder %s22, 7
      %p40 = por %p38, %p39
      %p41 = scmp.ne.s32.totalorder %s30, %s31
      %p42 = scmp.eq.s32.totalorder %s22, 0
      %p43 = por %p41, %p42
      %p44 = scmp.ne.s32.totalorder %s30, %s31
      %p45 = scmp.eq.s32.totalorder %s23, 7
      %p46 = por %p44, %p45
      %p48 = scmp.ne.s32.totalorder %s31, %s47
      %p49 = scmp.eq.s32.totalorder %s23, 0
      %p50 = por %p48, %p49
      %s51 = ssub.s32 %s17, %s24
      %p52 = scmp.eq.s32.totalorder %s51, 0
      %s54 = sadd.s32 %s53, 1
      %s55 = scalar_select %p52, %s53, %s54
      %p58 = pneg %p52
      %p59 = scmp.eq.s32.totalorder %s17, 7
      %p60 = por %p58, %p59
      %p61 = scmp.ne.s32.totalorder %s53, %s56
      %p62 = scmp.eq.s32.totalorder %s17, 0
      %p63 = por %p61, %p62
      %p64 = scmp.ne.s32.totalorder %s53, %s56
      %p65 = scmp.eq.s32.totalorder %s22, 7
      %p66 = por %p64, %p65
      %p67 = scmp.ne.s32.totalorder %s56, %s57
      %p68 = scmp.eq.s32.totalorder %s22, 0
      %p69 = por %p67, %p68
      %p70 = scmp.ne.s32.totalorder %s56, %s57
      %p71 = scmp.eq.s32.totalorder %s23, 7
      %p72 = por %p70, %p71
      %p74 = scmp.ne.s32.totalorder %s57, %s73
      %p75 = scmp.eq.s32.totalorder %s23, 0
      %p76 = por %p74, %p75
      %s78 = sadd.s32 %s77, 1
      %p81 = scmp.eq.s32.totalorder %s17, 7
      %p82 = scmp.ne.s32.totalorder %s77, %s79
      %p83 = scmp.eq.s32.totalorder %s17, 0
      %p84 = por %p82, %p83
      %p85 = scmp.ne.s32.totalorder %s77, %s79
      %p86 = scmp.eq.s32.totalorder %s22, 7
      %p87 = por %p85, %p86
      %p88 = scmp.ne.s32.totalorder %s79, %s80
      %p89 = scmp.eq.s32.totalorder %s22, 0
      %p90 = por %p88, %p89
      %p91 = scmp.ne.s32.totalorder %s79, %s80
      %p92 = scmp.eq.s32.totalorder %s23, 7
      %p93 = por %p91, %p92
      %p95 = scmp.ne.s32.totalorder %s80, %s94
      %p96 = scmp.eq.s32.totalorder %s23, 0
      %p97 = por %p95, %p96
      %s99 = sadd.s32 %s98, 1
      %p102 = scmp.eq.s32.totalorder %s17, 7
      %p103 = scmp.ne.s32.totalorder %s98, %s100
      %p104 = scmp.eq.s32.totalorder %s17, 0
      %p105 = por %p103, %p104
      %p106 = scmp.ne.s32.totalorder %s98, %s100
      %p107 = scmp.eq.s32.totalorder %s22, 7
      %p108 = por %p106, %p107
      %p109 = scmp.ne.s32.totalorder %s100, %s101
      %p110 = scmp.eq.s32.totalorder %s22, 0
      %p111 = por %p109, %p110
      %p112 = scmp.ne.s32.totalorder %s100, %s101
      %p113 = scmp.eq.s32.totalorder %s23, 7
      %p114 = por %p112, %p113
      %p116 = scmp.ne.s32.totalorder %s101, %s115
      %p117 = scmp.eq.s32.totalorder %s23, 0
      %p118 = por %p116, %p117
      %s120 = sadd.s32 %s119, 1
      %p123 = scmp.eq.s32.totalorder %s17, 7
      %p124 = scmp.ne.s32.totalorder %s119, %s121
      %p125 = scmp.eq.s32.totalorder %s17, 0
      %p126 = por %p124, %p125
      %p127 = scmp.ne.s32.totalorder %s119, %s121
      %p128 = scmp.eq.s32.totalorder %s22, 7
      %p129 = por %p127, %p128
      %p130 = scmp.ne.s32.totalorder %s121, %s122
      %p131 = scmp.eq.s32.totalorder %s22, 0
      %p132 = por %p130, %p131
      %p133 = scmp.ne.s32.totalorder %s121, %s122
      %p134 = scmp.eq.s32.totalorder %s23, 7
      %p135 = por %p133, %p134
      %p137 = scmp.ne.s32.totalorder %s122, %s136
      %p138 = scmp.eq.s32.totalorder %s23, 0
      %p139 = por %p137, %p138
      %s141 = sadd.s32 %s140, 1
      %p144 = scmp.eq.s32.totalorder %s17, 7
      %p145 = scmp.ne.s32.totalorder %s140, %s142
      %p146 = scmp.eq.s32.totalorder %s17, 0
      %p147 = por %p145, %p146
      %p148 = scmp.ne.s32.totalorder %s140, %s142
      %p149 = scmp.eq.s32.totalorder %s22, 7
      %p150 = por %p148, %p149
      %p151 = scmp.ne.s32.totalorder %s142, %s143
      %p152 = scmp.eq.s32.totalorder %s22, 0
      %p153 = por %p151, %p152
      %p154 = scmp.ne.s32.totalorder %s142, %s143
      %p155 = scmp.eq.s32.totalorder %s23, 7
      %p156 = por %p154, %p155
      %p158 = scmp.ne.s32.totalorder %s143, %s157
      %p159 = scmp.eq.s32.totalorder %s23, 0
      %p160 = por %p158, %p159
      %s162 = sadd.s32 %s161, 1
      %p165 = scmp.eq.s32.totalorder %s17, 7
      %p166 = scmp.ne.s32.totalorder %s161, %s163
      %p167 = scmp.eq.s32.totalorder %s17, 0
      %p168 = por %p166, %p167
      %p169 = scmp.ne.s32.totalorder %s161, %s163
      %p170 = scmp.eq.s32.totalorder %s22, 7
      %p171 = por %p169, %p170
      %p172 = scmp.ne.s32.totalorder %s163, %s164
      %p173 = scmp.eq.s32.totalorder %s22, 0
      %p174 = por %p172, %p173
      %p175 = scmp.ne.s32.totalorder %s163, %s164
      %p176 = scmp.eq.s32.totalorder %s23, 7
      %p177 = por %p175, %p176
      %p179 = scmp.ne.s32.totalorder %s164, %s178
      %p180 = scmp.eq.s32.totalorder %s23, 0
      %p181 = por %p179, %p180
      %s183 = sadd.s32 %s182, 1
      %p186 = scmp.eq.s32.totalorder %s17, 7
      %p187 = scmp.ne.s32.totalorder %s182, %s184
      %p188 = scmp.eq.s32.totalorder %s17, 0
      %p189 = por %p187, %p188
      %p190 = scmp.ne.s32.totalorder %s182, %s184
      %p191 = scmp.eq.s32.totalorder %s22, 7
      %p192 = por %p190, %p191
      %p193 = scmp.ne.s32.totalorder %s184, %s185
      %p194 = scmp.eq.s32.totalorder %s22, 0
      %p195 = por %p193, %p194
      %p196 = scmp.ne.s32.totalorder %s184, %s185
      %p197 = scmp.eq.s32.totalorder %s23, 7
      %p198 = por %p196, %p197
      %p200 = scmp.ne.s32.totalorder %s185, %s199
      %p201 = scmp.eq.s32.totalorder %s23, 0
      %p202 = por %p200, %p201
      %s203 = ssub.s32 %s17, %s24
      %p204 = scmp.eq.s32.totalorder %s203, 0
      %s206 = sadd.s32 %s205, 1
      %s207 = scalar_select %p204, %s205, %s206
      %p210 = pneg %p204
      %p211 = scmp.eq.s32.totalorder %s17, 7
      %p212 = por %p210, %p211
      %p213 = scmp.ne.s32.totalorder %s205, %s208
      %p214 = scmp.eq.s32.totalorder %s17, 0
      %p215 = por %p213, %p214
      %p216 = scmp.ne.s32.totalorder %s205, %s208
      %p217 = scmp.eq.s32.totalorder %s22, 7
      %p218 = por %p216, %p217
      %p219 = scmp.ne.s32.totalorder %s208, %s209
      %p220 = scmp.eq.s32.totalorder %s22, 0
      %p221 = por %p219, %p220
      %p222 = scmp.ne.s32.totalorder %s208, %s209
      %p223 = scmp.eq.s32.totalorder %s23, 7
      %p224 = por %p222, %p223
      %p226 = scmp.ne.s32.totalorder %s209, %s225
      %p227 = scmp.eq.s32.totalorder %s23, 0
      %p228 = por %p226, %p227
      %p229 = scmp.le.s32.totalorder 1, %s17
      %p230 = scmp.lt.s32.totalorder %s17, 9
      %p231 = pnand %p229, %p230
      %p232 = pneg %p231
      // Predicated region
      $region9: #{tpu_custom_call.1} parent=5 // pred_check
        _
      $region10: #{tpu_custom_call.1} parent=5 // pred_check_branch
        %234 = sbr.rel (%p231) target = $region12
      $region11: #{tpu_custom_call.1} parent=5 // pred_region
        %s235 = ssub.s32 %s17, 1
        // Predicated region
        $region13: #{tpu_custom_call.1} parent=11 // pred_check
          %p236 = pneg %p90
        $region14: #{tpu_custom_call.1} parent=11 // pred_check_branch
          %238 = sbr.rel (%p236) target = $region16
        $region15: #{tpu_custom_call.1} parent=11 // pred_region
          _
        $region16: #{tpu_custom_call.1} parent=11 // pred_fallthru
          _
        // Predicated region
        $region17: #{tpu_custom_call.1} parent=11 // pred_check
          %p239 = pneg %p111
        $region18: #{tpu_custom_call.1} parent=11 // pred_check_branch
          %241 = sbr.rel (%p239) target = $region20
        $region19: #{tpu_custom_call.1} parent=11 // pred_region
          _
        $region20: #{tpu_custom_call.1} parent=11 // pred_fallthru
          _
        // Predicated region
        $region21: #{tpu_custom_call.1} parent=11 // pred_check
          %p242 = pneg %p132
        $region22: #{tpu_custom_call.1} parent=11 // pred_check_branch
          %244 = sbr.rel (%p242) target = $region24
        $region23: #{tpu_custom_call.1} parent=11 // pred_region
          _
        $region24: #{tpu_custom_call.1} parent=11 // pred_fallthru
          _
        // Predicated region
        $region25: #{tpu_custom_call.1} parent=11 // pred_check
          %p245 = pneg %p153
        $region26: #{tpu_custom_call.1} parent=11 // pred_check_branch
          %247 = sbr.rel (%p245) target = $region28
        $region27: #{tpu_custom_call.1} parent=11 // pred_region
          _
        $region28: #{tpu_custom_call.1} parent=11 // pred_fallthru
          _
        // Predicated region
        $region29: #{tpu_custom_call.1} parent=11 // pred_check
          %p248 = pneg %p174
        $region30: #{tpu_custom_call.1} parent=11 // pred_check_branch
          %250 = sbr.rel (%p248) target = $region32
        $region31: #{tpu_custom_call.1} parent=11 // pred_region
          _
        $region32: #{tpu_custom_call.1} parent=11 // pred_fallthru
          _
        // Predicated region
        $region33: #{tpu_custom_call.1} parent=11 // pred_check
          %p251 = pneg %p195
        $region34: #{tpu_custom_call.1} parent=11 // pred_check_branch
          %253 = sbr.rel (%p251) target = $region36
        $region35: #{tpu_custom_call.1} parent=11 // pred_region
          _
        $region36: #{tpu_custom_call.1} parent=11 // pred_fallthru
          _
      $region12: #{tpu_custom_call.1} parent=5 // pred_fallthru
        _
      %p254 = scmp.lt.s32.totalorder %s17, 8
      // Predicated region
      $region37: #{tpu_custom_call.1} parent=5 // pred_check
        %p255 = pneg %p254
      $region38: #{tpu_custom_call.1} parent=5 // pred_check_branch
        %257 = sbr.rel (%p255) target = $region40
      $region39: #{tpu_custom_call.1} parent=5 // pred_region
        // Predicated region
        $region41: #{tpu_custom_call.1} parent=39 // pred_check
          %p258 = pneg %p37
        $region42: #{tpu_custom_call.1} parent=39 // pred_check_branch
          %260 = sbr.rel (%p258) target = $region44
        $region43: #{tpu_custom_call.1} parent=39 // pred_region
          %p261 = scmp.lt.s32.totalorder %s17, 7
          %s262 = scalar_select %p261, %s17, 7
          %s263 = smul.addr %s262, 8
          %s264 = smul.addr %s263, 4
          %s265 = scalar_lea.vmem %s0, %s264
        $region44: #{tpu_custom_call.1} parent=39 // pred_fallthru
          _
        // Predicated region
        $region45: #{tpu_custom_call.1} parent=39 // pred_check
          %p266 = pneg %p63
        $region46: #{tpu_custom_call.1} parent=39 // pred_check_branch
          %268 = sbr.rel (%p266) target = $region48
        $region47: #{tpu_custom_call.1} parent=39 // pred_region
          %p269 = scmp.lt.s32.totalorder %s17, 7
          %s270 = scalar_select %p269, %s17, 7
          %s271 = smul.addr %s270, 8
          %s272 = smul.addr %s271, 4
          %s273 = scalar_lea.vmem %s1, %s272
        $region48: #{tpu_custom_call.1} parent=39 // pred_fallthru
          _
      $region40: #{tpu_custom_call.1} parent=5 // pred_fallthru
        _
      %p274 = scmp.le.s32.totalorder 1, %s17
      %p275 = scmp.lt.s32.totalorder %s17, 9
      %p276 = pnand %p274, %p275
      %p277 = pneg %p276
      // Predicated region
      $region49: #{tpu_custom_call.1} parent=5 // pred_check
        _
      $region50: #{tpu_custom_call.1} parent=5 // pred_check_branch
        %279 = sbr.rel (%p276) target = $region52
      $region51: #{tpu_custom_call.1} parent=5 // pred_region
        %s280 = ssub.s32 %s17, 1
        %p281 = scmp.lt.s32.totalorder %s22, 7
        %s282 = scalar_select %p281, %s22, 7
        %s283 = smul.addr %s282, 8
        %s284 = smul.addr %s283, 4
        %s285 = scalar_lea.vmem %s0, %s284
        %p286 = pneg %p43
        %p287 = pneg %p40
        %p288 = scmp.lt.s32.totalorder %s22, 7
        %s289 = scalar_select %p288, %s22, 7
        %s290 = smul.addr %s289, 8
        %s291 = smul.addr %s290, 4
        %s292 = scalar_lea.vmem %s1, %s291
        %p293 = pneg %p69
        %p294 = pneg %p66
        %p295 = pneg %p90
        %p296 = pneg %p87
        %p297 = pneg %p111
        %p298 = pneg %p108
        %p299 = pneg %p132
        %p300 = pneg %p129
        %p301 = pneg %p153
        %p302 = pneg %p150
        %p303 = pneg %p174
        %p304 = pneg %p171
        %p305 = pneg %p195
        %p306 = pneg %p192
        %p307 = pneg %p221
        %p308 = pneg %p218
        %s309 = sand.u32 %s208, 1
        %s310 = scalar_lea.sflag [#allocation3], %s309
        %s311 = sand.u32 %s208, 1
        %s312 = scalar_lea.vmem [#allocation2], %s311
        %p313 = scmp.lt.s32.totalorder %s22, 7
        %s314 = scalar_select %p313, %s22, 7
        %s315 = smul.addr %s314, 8
        %s316 = smul.addr %s315, 4
        %s317 = scalar_lea.vmem %s0, %s316
        %p318 = scmp.lt.s32.totalorder %s22, 7
        %s319 = scalar_select %p318, %s22, 7
        %s320 = smul.addr %s319, 8
        %s321 = smul.addr %s320, 4
        %s322 = scalar_lea.vmem %s1, %s321
        %v324 = vld [vmem:[%s317] sm:$0xf]
        %v325 = vld [vmem:[%s317 + $0x4] sm:$0xf]
        %v326 = vld [vmem:[%s317 + $0x8] sm:$0xf]
        %v327 = vld [vmem:[%s317 + $0xc] sm:$0xf]
        %v328 = vld [vmem:[%s317 + $0x10] sm:$0xf]
        %v329 = vld [vmem:[%s317 + $0x14] sm:$0xf]
        %v330 = vld [vmem:[%s317 + $0x18] sm:$0xf]
        %v331 = vld [vmem:[%s317 + $0x1c] sm:$0xf]
        %v332 = vld [vmem:[%s322] sm:$0xf]
        %v333 = vld [vmem:[%s322 + $0x4] sm:$0xf]
        %v334 = vld [vmem:[%s322 + $0x8] sm:$0xf]
        %v335 = vld [vmem:[%s322 + $0xc] sm:$0xf]
        %v336 = vld [vmem:[%s322 + $0x10] sm:$0xf]
        %v337 = vld [vmem:[%s322 + $0x14] sm:$0xf]
        %v338 = vld [vmem:[%s322 + $0x18] sm:$0xf]
        %v339 = vld [vmem:[%s322 + $0x1c] sm:$0xf]
        %v348 = vunpack.c.l.b16 %v324
        %v349 = vunpack.c.l.b16 %v325
        %v350 = vunpack.c.l.b16 %v326
        %v351 = vunpack.c.l.b16 %v327
        %v352 = vunpack.c.l.b16 %v328
        %v353 = vunpack.c.l.b16 %v329
        %v354 = vunpack.c.l.b16 %v330
        %v355 = vunpack.c.l.b16 %v331
        %v356 = vpack.c.b16 %v349, %v348
        %v357 = vpack.c.b16 %v351, %v350
        %v358 = vpack.c.b16 %v353, %v352
        %v359 = vpack.c.b16 %v355, %v354
        %v368 = vunpack.c.l.b16 %v332
        %v369 = vunpack.c.l.b16 %v333
        %v370 = vunpack.c.l.b16 %v334
        %v371 = vunpack.c.l.b16 %v335
        %v372 = vunpack.c.l.b16 %v336
        %v373 = vunpack.c.l.b16 %v337
        %v374 = vunpack.c.l.b16 %v338
        %v375 = vunpack.c.l.b16 %v339
        %v376 = vpack.c.b16 %v369, %v368
        %v377 = vpack.c.b16 %v371, %v370
        %v378 = vpack.c.b16 %v373, %v372
        %v379 = vpack.c.b16 %v375, %v374
        %vm384 = vcmask 523264
        %v386 = vsel %vm384, %v356, 0
        %v389 = vsel %vm384, %v357, 0
        %v392 = vsel %vm384, %v358, 0
        %v395 = vsel %vm384, %v359, 0
        %397 = vmatprep.subr.bf16.mxu0 0
        %398 = vmatpush1.bf16.msra.mxu0 %v376
        %399 = vmatprep.subr.bf16.mxu0 0
        %400 = vmatpush1.bf16.msra.mxu0 %v377
        %401 = vmatprep.subr.bf16.mxu0 0
        %402 = vmatpush1.bf16.msra.mxu0 %v378
        %403 = vmatprep.subr.bf16.mxu0 0
        %404 = vmatpush1.bf16.msra.mxu0 %v379
        %405 = vmatprep.subr.bf16.mxu0 0
        %406 = vmatpush1.bf16.msra.mxu0 0
        %407 = vmatprep.subr.bf16.mxu0 0
        %408 = vmatpush1.bf16.msra.mxu0 0
        %409 = vmatprep.subr.bf16.mxu0 0
        %410 = vmatpush1.bf16.msra.mxu0 0
        %411 = vmatprep.subr.bf16.mxu0 0
        %412 = vmatpush1.bf16.msra.mxu0 0
        %413 = vmatprep.subr.bf16.mxu0 0
        %414 = vmatpush1.bf16.msra.mxu0 0
        %415 = vmatprep.subr.bf16.mxu0 0
        %416 = vmatpush1.bf16.msra.mxu0 0
        %417 = vmatprep.subr.bf16.mxu0 0
        %418 = vmatpush1.bf16.msra.mxu0 0
        %419 = vmatprep.subr.bf16.mxu0 0
        %420 = vmatpush1.bf16.msra.mxu0 0
        %421 = vmatprep.subr.bf16.mxu0 0
        %422 = vmatpush1.bf16.msra.mxu0 0
        %423 = vmatprep.subr.bf16.mxu0 0
        %424 = vmatpush1.bf16.msra.mxu0 0
        %425 = vmatprep.subr.bf16.mxu0 0
        %426 = vmatpush1.bf16.msra.mxu0 0
        %427 = vmatprep.subr.bf16.mxu0 0
        %428 = vmatpush1.bf16.msra.mxu0 0
        %429 = vmatprep.mubr.bf16.mxu0 0
        %430 = vmatmul.mubr.bf16.gmra.mrb[0].mxu0 %v386
        %v431 = vpop.f32.mrb[0].mxu0
        %v432 = vadd.f32 0.0, %v431
        %v433 = vpop.f32.mrb[0].mxu0
        %v434 = vpop.f32.mrb[0].mxu0
        %v435 = vadd.f32 0.0, %v434
        %v436 = vpop.f32.mrb[0].mxu0
        %437 = vmatprep.mubr.bf16.mxu0 0
        %438 = vmatmul.mubr.bf16.gmra.mrb[0].mxu0 %v389
        %v439 = vpop.f32.mrb[0].mxu0
        %v440 = vadd.f32 0.0, %v439
        %v441 = vpop.f32.mrb[0].mxu0
        %v442 = vpop.f32.mrb[0].mxu0
        %v443 = vadd.f32 0.0, %v442
        %v444 = vpop.f32.mrb[0].mxu0
        %445 = vmatprep.mubr.bf16.mxu0 0
        %446 = vmatmul.mubr.bf16.gmra.mrb[0].mxu0 %v392
        %v447 = vpop.f32.mrb[0].mxu0
        %v448 = vadd.f32 0.0, %v447
        %v449 = vpop.f32.mrb[0].mxu0
        %v450 = vpop.f32.mrb[0].mxu0
        %v451 = vadd.f32 0.0, %v450
        %v452 = vpop.f32.mrb[0].mxu0
        %453 = vmatprep.mubr.bf16.mxu0 0
        %454 = vmatmul.mubr.bf16.gmra.mrb[0].mxu0 %v395
        %v455 = vpop.f32.mrb[0].mxu0
        %v456 = vadd.f32 0.0, %v455
        %v457 = vpop.f32.mrb[0].mxu0
        %v458 = vpop.f32.mrb[0].mxu0
        %v459 = vadd.f32 0.0, %v458
        %v460 = vpop.f32.mrb[0].mxu0
        %461 = vdwg.mxu0
        %v462 = vpack.c.bf16 %v435, %v432
        %v463 = vpack.c.bf16 %v443, %v440
        %v464 = vpack.c.bf16 %v451, %v448
        %v465 = vpack.c.bf16 %v459, %v456
        %v466 = vld [vmem:[%s2] sm:$0xf]
        %v467 = vld [vmem:[%s2 + $0x4] sm:$0xf]
        %v468 = vld [vmem:[%s3] sm:$0x1]
        %v470 = vlaneseq
        %v471 = vshrl.u32 %v470, 7
        %v472 = vsub.s32 0, %v471
        %v473 = vrot.slane %v468, %v472
        %v477 = vunpack.c.l.b16 %v466
        %v478 = vunpack.c.l.b16 %v467
        %v479 = vpack.c.b16 %v478, %v477
        %vm481 = vcmask 130048
        %v483 = vsel %vm481, %v462, 0
        %v486 = vsel %vm481, %v463, 0
        %v489 = vsel %vm481, %v464, 0
        %v492 = vsel %vm481, %v465, 0
        %494 = vmatprep.subr.bf16.mxu0 0
        %495 = vmatpush1.bf16.msra.mxu0 %v479
        %496 = vmatprep.subr.bf16.mxu0 0
        %497 = vmatpush1.bf16.msra.mxu0 0
        %498 = vmatprep.subr.bf16.mxu0 0
        %499 = vmatpush1.bf16.msra.mxu0 0
        %500 = vmatprep.subr.bf16.mxu0 0
        %501 = vmatpush1.bf16.msra.mxu0 0
        %502 = vmatprep.subr.bf16.mxu0 0
        %503 = vmatpush1.bf16.msra.mxu0 0
        %504 = vmatprep.subr.bf16.mxu0 0
        %505 = vmatpush1.bf16.msra.mxu0 0
        %506 = vmatprep.subr.bf16.mxu0 0
        %507 = vmatpush1.bf16.msra.mxu0 0
        %508 = vmatprep.subr.bf16.mxu0 0
        %509 = vmatpush1.bf16.msra.mxu0 0
        %510 = vmatprep.subr.bf16.mxu0 0
        %511 = vmatpush1.bf16.msra.mxu0 0
        %512 = vmatprep.subr.bf16.mxu0 0
        %513 = vmatpush1.bf16.msra.mxu0 0
        %514 = vmatprep.subr.bf16.mxu0 0
        %515 = vmatpush1.bf16.msra.mxu0 0
        %516 = vmatprep.subr.bf16.mxu0 0
        %517 = vmatpush1.bf16.msra.mxu0 0
        %518 = vmatprep.subr.bf16.mxu0 0
        %519 = vmatpush1.bf16.msra.mxu0 0
        %520 = vmatprep.subr.bf16.mxu0 0
        %521 = vmatpush1.bf16.msra.mxu0 0
        %522 = vmatprep.subr.bf16.mxu0 0
        %523 = vmatpush1.bf16.msra.mxu0 0
        %524 = vmatprep.subr.bf16.mxu0 0
        %525 = vmatpush1.bf16.msra.mxu0 0
        %526 = vmatprep.mubr.bf16.mxu0 0
        %527 = vmatmul.mubr.bf16.gmra.mrb[0].mxu0 %v483
        %v528 = vpop.f32.mrb[0].mxu0
        %v529 = vadd.f32 %v473, %v528
        %v530 = vpop.f32.mrb[0].mxu0
        %v531 = vpop.f32.mrb[0].mxu0
        %v532 = vadd.f32 %v473, %v531
        %v533 = vpop.f32.mrb[0].mxu0
        %534 = vmatprep.mubr.bf16.mxu0 0
        %535 = vmatmul.mubr.bf16.gmra.mrb[0].mxu0 %v486
        %v536 = vpop.f32.mrb[0].mxu0
        %v537 = vadd.f32 %v473, %v536
        %v538 = vpop.f32.mrb[0].mxu0
        %v539 = vpop.f32.mrb[0].mxu0
        %v540 = vadd.f32 %v473, %v539
        %v541 = vpop.f32.mrb[0].mxu0
        %542 = vmatprep.mubr.bf16.mxu0 0
        %543 = vmatmul.mubr.bf16.gmra.mrb[0].mxu0 %v489
        %v544 = vpop.f32.mrb[0].mxu0
        %v545 = vadd.f32 %v473, %v544
        %v546 = vpop.f32.mrb[0].mxu0
        %v547 = vpop.f32.mrb[0].mxu0
        %v548 = vadd.f32 %v473, %v547
        %v549 = vpop.f32.mrb[0].mxu0
        %550 = vmatprep.mubr.bf16.mxu0 0
        %551 = vmatmul.mubr.bf16.gmra.mrb[0].mxu0 %v492
        %v552 = vpop.f32.mrb[0].mxu0
        %v553 = vadd.f32 %v473, %v552
        %v554 = vpop.f32.mrb[0].mxu0
        %v555 = vpop.f32.mrb[0].mxu0
        %v556 = vadd.f32 %v473, %v555
        %v557 = vpop.f32.mrb[0].mxu0
        %558 = vdwg.mxu0
        %v559 = vmax.f32 %v529, 0.0
        %v560 = vmax.f32 %v532, 0.0
        %v561 = vmax.f32 %v537, 0.0
        %v562 = vmax.f32 %v540, 0.0
        %v563 = vmax.f32 %v545, 0.0
        %v564 = vmax.f32 %v548, 0.0
        %v565 = vmax.f32 %v553, 0.0
        %v566 = vmax.f32 %v556, 0.0
        %v567 = vpack.c.bf16 %v560, %v559
        %v568 = vpack.c.bf16 %v562, %v561
        %v569 = vpack.c.bf16 %v564, %v563
        %v570 = vpack.c.bf16 %v566, %v565
        %571 = vmatprep.subr.bf16.mxu0 0
        %572 = vmatpush1.bf16.msra.mxu0 %v567
        %573 = vmatprep.subr.bf16.mxu0 0
        %574 = vmatpush1.bf16.msra.mxu0 %v568
        %575 = vmatprep.subr.bf16.mxu0 0
        %576 = vmatpush1.bf16.msra.mxu0 %v569
        %577 = vmatprep.subr.bf16.mxu0 0
        %578 = vmatpush1.bf16.msra.mxu0 %v570
        %579 = vmatprep.subr.bf16.mxu0 0
        %580 = vmatpush1.bf16.msra.mxu0 0
        %581 = vmatprep.subr.bf16.mxu0 0
        %582 = vmatpush1.bf16.msra.mxu0 0
        %583 = vmatprep.subr.bf16.mxu0 0
        %584 = vmatpush1.bf16.msra.mxu0 0
        %585 = vmatprep.subr.bf16.mxu0 0
        %586 = vmatpush1.bf16.msra.mxu0 0
        %587 = vmatprep.subr.bf16.mxu0 0
        %588 = vmatpush1.bf16.msra.mxu0 0
        %589 = vmatprep.subr.bf16.mxu0 0
        %590 = vmatpush1.bf16.msra.mxu0 0
        %591 = vmatprep.subr.bf16.mxu0 0
        %592 = vmatpush1.bf16.msra.mxu0 0
        %593 = vmatprep.subr.bf16.mxu0 0
        %594 = vmatpush1.bf16.msra.mxu0 0
        %595 = vmatprep.subr.bf16.mxu0 0
        %596 = vmatpush1.bf16.msra.mxu0 0
        %597 = vmatprep.subr.bf16.mxu0 0
        %598 = vmatpush1.bf16.msra.mxu0 0
        %599 = vmatprep.subr.bf16.mxu0 0
        %600 = vmatpush1.bf16.msra.mxu0 0
        %601 = vmatprep.subr.bf16.mxu0 0
        %602 = vmatpush1.bf16.msra.mxu0 0
        %603 = vmatprep.mubr.bf16.mxu0 0
        %604 = vmatmul.mubr.bf16.gmra.mrb[0].mxu0 %v386
        %v605 = vpop.f32.mrb[0].mxu0
        %v606 = vadd.f32 0.0, %v605
        %v607 = vpop.f32.mrb[0].mxu0
        %v608 = vpop.f32.mrb[0].mxu0
        %v609 = vadd.f32 0.0, %v608
        %v610 = vpop.f32.mrb[0].mxu0
        %611 = vmatprep.mubr.bf16.mxu0 0
        %612 = vmatmul.mubr.bf16.gmra.mrb[0].mxu0 %v389
        %v613 = vpop.f32.mrb[0].mxu0
        %v614 = vadd.f32 0.0, %v613
        %v615 = vpop.f32.mrb[0].mxu0
        %v616 = vpop.f32.mrb[0].mxu0
        %v617 = vadd.f32 0.0, %v616
        %v618 = vpop.f32.mrb[0].mxu0
        %619 = vmatprep.mubr.bf16.mxu0 0
        %620 = vmatmul.mubr.bf16.gmra.mrb[0].mxu0 %v392
        %v621 = vpop.f32.mrb[0].mxu0
        %v622 = vadd.f32 0.0, %v621
        %v623 = vpop.f32.mrb[0].mxu0
        %v624 = vpop.f32.mrb[0].mxu0
        %v625 = vadd.f32 0.0, %v624
        %v626 = vpop.f32.mrb[0].mxu0
        %627 = vmatprep.mubr.bf16.mxu0 0
        %628 = vmatmul.mubr.bf16.gmra.mrb[0].mxu0 %v395
        %v629 = vpop.f32.mrb[0].mxu0
        %v630 = vadd.f32 0.0, %v629
        %v631 = vpop.f32.mrb[0].mxu0
        %v632 = vpop.f32.mrb[0].mxu0
        %v633 = vadd.f32 0.0, %v632
        %v634 = vpop.f32.mrb[0].mxu0
        %635 = vdwg.mxu0
        %v636 = vpack.c.bf16 %v609, %v606
        %v637 = vpack.c.bf16 %v617, %v614
        %v638 = vpack.c.bf16 %v625, %v622
        %v639 = vpack.c.bf16 %v633, %v630
        %v640 = vld [vmem:[%s4] sm:$0xf]
        %v641 = vld [vmem:[%s4 + $0x4] sm:$0xf]
        %v642 = vld [vmem:[%s4 + $0x8] sm:$0xf]
        %v643 = vld [vmem:[%s4 + $0xc] sm:$0xf]
        %v644 = vld [vmem:[%s5] sm:$0x1]
        %v646 = vlaneseq
        %v647 = vshrl.u32 %v646, 7
        %v648 = vsub.s32 0, %v647
        %v649 = vrot.slane %v644, %v648
        %v655 = vunpack.c.l.b16 %v640
        %v656 = vunpack.c.l.b16 %v641
        %v657 = vunpack.c.l.b16 %v642
        %v658 = vunpack.c.l.b16 %v643
        %v659 = vpack.c.b16 %v656, %v655
        %v660 = vpack.c.b16 %v658, %v657
        %vm663 = vcmask 261120
        %v665 = vsel %vm663, %v636, 0
        %v668 = vsel %vm663, %v637, 0
        %v671 = vsel %vm663, %v638, 0
        %v674 = vsel %vm663, %v639, 0
        %676 = vmatprep.subr.bf16.mxu0 0
        %677 = vmatpush1.bf16.msra.mxu0 %v659
        %678 = vmatprep.subr.bf16.mxu0 0
        %679 = vmatpush1.bf16.msra.mxu0 %v660
        %680 = vmatprep.subr.bf16.mxu0 0
        %681 = vmatpush1.bf16.msra.mxu0 0
        %682 = vmatprep.subr.bf16.mxu0 0
        %683 = vmatpush1.bf16.msra.mxu0 0
        %684 = vmatprep.subr.bf16.mxu0 0
        %685 = vmatpush1.bf16.msra.mxu0 0
        %686 = vmatprep.subr.bf16.mxu0 0
        %687 = vmatpush1.bf16.msra.mxu0 0
        %688 = vmatprep.subr.bf16.mxu0 0
        %689 = vmatpush1.bf16.msra.mxu0 0
        %690 = vmatprep.subr.bf16.mxu0 0
        %691 = vmatpush1.bf16.msra.mxu0 0
        %692 = vmatprep.subr.bf16.mxu0 0
        %693 = vmatpush1.bf16.msra.mxu0 0
        %694 = vmatprep.subr.bf16.mxu0 0
        %695 = vmatpush1.bf16.msra.mxu0 0
        %696 = vmatprep.subr.bf16.mxu0 0
        %697 = vmatpush1.bf16.msra.mxu0 0
        %698 = vmatprep.subr.bf16.mxu0 0
        %699 = vmatpush1.bf16.msra.mxu0 0
        %700 = vmatprep.subr.bf16.mxu0 0
        %701 = vmatpush1.bf16.msra.mxu0 0
        %702 = vmatprep.subr.bf16.mxu0 0
        %703 = vmatpush1.bf16.msra.mxu0 0
        %704 = vmatprep.subr.bf16.mxu0 0
        %705 = vmatpush1.bf16.msra.mxu0 0
        %706 = vmatprep.subr.bf16.mxu0 0
        %707 = vmatpush1.bf16.msra.mxu0 0
        %708 = vmatprep.mubr.bf16.mxu0 0
        %709 = vmatmul.mubr.bf16.gmra.mrb[0].mxu0 %v665
        %v710 = vpop.f32.mrb[0].mxu0
        %v711 = vadd.f32 %v649, %v710
        %v712 = vpop.f32.mrb[0].mxu0
        %v713 = vpop.f32.mrb[0].mxu0
        %v714 = vadd.f32 %v649, %v713
        %v715 = vpop.f32.mrb[0].mxu0
        %716 = vmatprep.mubr.bf16.mxu0 0
        %717 = vmatmul.mubr.bf16.gmra.mrb[0].mxu0 %v668
        %v718 = vpop.f32.mrb[0].mxu0
        %v719 = vadd.f32 %v649, %v718
        %v720 = vpop.f32.mrb[0].mxu0
        %v721 = vpop.f32.mrb[0].mxu0
        %v722 = vadd.f32 %v649, %v721
        %v723 = vpop.f32.mrb[0].mxu0
        %724 = vmatprep.mubr.bf16.mxu0 0
        %725 = vmatmul.mubr.bf16.gmra.mrb[0].mxu0 %v671
        %v726 = vpop.f32.mrb[0].mxu0
        %v727 = vadd.f32 %v649, %v726
        %v728 = vpop.f32.mrb[0].mxu0
        %v729 = vpop.f32.mrb[0].mxu0
        %v730 = vadd.f32 %v649, %v729
        %v731 = vpop.f32.mrb[0].mxu0
        %732 = vmatprep.mubr.bf16.mxu0 0
        %733 = vmatmul.mubr.bf16.gmra.mrb[0].mxu0 %v674
        %v734 = vpop.f32.mrb[0].mxu0
        %v735 = vadd.f32 %v649, %v734
        %v736 = vpop.f32.mrb[0].mxu0
        %v737 = vpop.f32.mrb[0].mxu0
        %v738 = vadd.f32 %v649, %v737
        %v739 = vpop.f32.mrb[0].mxu0
        %740 = vdwg.mxu0
        %v741 = vmax.f32 %v711, 0.0
        %v742 = vmax.f32 %v714, 0.0
        %v743 = vmax.f32 %v719, 0.0
        %v744 = vmax.f32 %v722, 0.0
        %v745 = vmax.f32 %v727, 0.0
        %v746 = vmax.f32 %v730, 0.0
        %v747 = vmax.f32 %v735, 0.0
        %v748 = vmax.f32 %v738, 0.0
        %v749 = vsel %vm663, %v741, 0.0
        %v750 = vsel %vm663, %v742, 0.0
        %v751 = vadd.f32 %v749, %v750
        %v752 = vsel %vm663, %v743, 0.0
        %v753 = vadd.f32 %v751, %v752
        %v754 = vsel %vm663, %v744, 0.0
        %v755 = vadd.f32 %v753, %v754
        %v756 = vsel %vm663, %v745, 0.0
        %v757 = vadd.f32 %v755, %v756
        %v758 = vsel %vm663, %v746, 0.0
        %v759 = vadd.f32 %v757, %v758
        %v760 = vsel %vm663, %v747, 0.0
        %v761 = vadd.f32 %v759, %v760
        %v762 = vsel %vm663, %v748, 0.0
        %v763 = vadd.f32 %v761, %v762
        %v764 = vrot.slane %v763, 4
        %v765 = vadd.f32 %v763, %v764
        %v766 = vrot.slane %v765, 2
        %v767 = vadd.f32 %v765, %v766
        %v768 = vrot.slane %v767, 1
        %v769 = vadd.f32 %v767, %v768
        %v770 = vmul.f32 %v769, 0.015625
        %v771 = vpack.c.bf16 %v770, %v770
        %v772 = vld [vmem:[%s6] sm:$0xf]
        %v773 = vld [vmem:[%s6 + $0x4] sm:$0xf]
        %v774 = vld [vmem:[%s6 + $0x8] sm:$0xf]
        %v775 = vld [vmem:[%s6 + $0xc] sm:$0xf]
        %v776 = vld [vmem:[%s7] sm:$0x1]
        %v781 = vunpack.c.l.b16 %v772
        %v782 = vunpack.c.l.b16 %v773
        %v783 = vunpack.c.l.b16 %v774
        %v784 = vunpack.c.l.b16 %v775
        %v785 = vpack.c.b16 %v782, %v781
        %v786 = vpack.c.b16 %v784, %v783
        %v790 = vsel %vm663, %v771, 0
        %792 = vmatprep.subr.bf16.mxu0 0
        %793 = vmatpush1.bf16.msra.mxu0 %v785
        %794 = vmatprep.subr.bf16.mxu0 0
        %795 = vmatpush1.bf16.msra.mxu0 %v786
        %796 = vmatprep.subr.bf16.mxu0 0
        %797 = vmatpush1.bf16.msra.mxu0 0
        %798 = vmatprep.subr.bf16.mxu0 0
        %799 = vmatpush1.bf16.msra.mxu0 0
        %800 = vmatprep.subr.bf16.mxu0 0
        %801 = vmatpush1.bf16.msra.mxu0 0
        %802 = vmatprep.subr.bf16.mxu0 0
        %803 = vmatpush1.bf16.msra.mxu0 0
        %804 = vmatprep.subr.bf16.mxu0 0
        %805 = vmatpush1.bf16.msra.mxu0 0
        %806 = vmatprep.subr.bf16.mxu0 0
        %807 = vmatpush1.bf16.msra.mxu0 0
        %808 = vmatprep.subr.bf16.mxu0 0
        %809 = vmatpush1.bf16.msra.mxu0 0
        %810 = vmatprep.subr.bf16.mxu0 0
        %811 = vmatpush1.bf16.msra.mxu0 0
        %812 = vmatprep.subr.bf16.mxu0 0
        %813 = vmatpush1.bf16.msra.mxu0 0
        %814 = vmatprep.subr.bf16.mxu0 0
        %815 = vmatpush1.bf16.msra.mxu0 0
        %816 = vmatprep.subr.bf16.mxu0 0
        %817 = vmatpush1.bf16.msra.mxu0 0
        %818 = vmatprep.subr.bf16.mxu0 0
        %819 = vmatpush1.bf16.msra.mxu0 0
        %820 = vmatprep.subr.bf16.mxu0 0
        %821 = vmatpush1.bf16.msra.mxu0 0
        %822 = vmatprep.subr.bf16.mxu0 0
        %823 = vmatpush1.bf16.msra.mxu0 0
        %824 = vmatprep.mubr.bf16.mxu0 0
        %825 = vmatmul.mubr.bf16.gmra.mrb[0].mxu0 %v790
        %v826 = vpop.f32.mrb[0].mxu0
        %v827 = vadd.f32 %v776, %v826
        %v828 = vpop.f32.mrb[0].mxu0
        %v829 = vpop.f32.mrb[0].mxu0
        %v830 = vpop.f32.mrb[0].mxu0
        %831 = vdwg.mxu0
        %832 = vst [vmem:[%s312] sm:$0x1] %v827
        %s833 = sand.u32 %s208, 1
        %s834 = scalar_lea.sflag [#allocation3], %s833
        %s835 = sand.u32 %s208, 1
        %s836 = scalar_lea.vmem [#allocation2], %s835
        // Predicated region
        $region53: #{tpu_custom_call.1} parent=51 // pred_check
          %p837 = pneg %p218
        $region54: #{tpu_custom_call.1} parent=51 // pred_check_branch
          %839 = sbr.rel (%p837) target = $region56
        $region55: #{tpu_custom_call.1} parent=51 // pred_region
          %s841 = ssub.s32 16, 16
          %842 = vsyncadd %s834, %s841
          %s843 = smul.addr %s22, 16
          %s844 = scalar_lea.hbm %s8, %s843
          %s846 = sshll.u32 %s836, 4
          %s847 = int_to_ptr.vmem [resolvable:$true] %s846
          %849 = dma.vmem_to_hbm [thread:$0]  %s847, 16, %s844, %s834
        $region56: #{tpu_custom_call.1} parent=51 // pred_fallthru
          _
      $region52: #{tpu_custom_call.1} parent=5 // pred_fallthru
        _
      %p850 = scmp.le.s32.totalorder 2, %s17
      // Predicated region
      $region57: #{tpu_custom_call.1} parent=5 // pred_check
        %p851 = pneg %p850
      $region58: #{tpu_custom_call.1} parent=5 // pred_check_branch
        %853 = sbr.rel (%p851) target = $region60
      $region59: #{tpu_custom_call.1} parent=5 // pred_region
        %s854 = ssub.s32 %s17, 2
        // Predicated region
        $region61: #{tpu_custom_call.1} parent=59 // pred_check
          %p855 = pneg %p224
        $region62: #{tpu_custom_call.1} parent=59 // pred_check_branch
          %857 = sbr.rel (%p855) target = $region64
        $region63: #{tpu_custom_call.1} parent=59 // pred_region
          %s858 = sand.u32 %s209, 1
          %s859 = scalar_lea.sflag [#allocation3], %s858
          %s860 = sand.u32 %s209, 1
          %s861 = scalar_lea.vmem [#allocation2], %s860
          %862 = dma.done %s859, 16
        $region64: #{tpu_custom_call.1} parent=59 // pred_fallthru
          _
      $region60: #{tpu_custom_call.1} parent=5 // pred_fallthru
        _
    $region6: #{tpu_custom_call.1} parent=1 // loop_footer
      %s21 = sadd.s32 1, %s17
    $region7: #{tpu_custom_call.1} parent=1 // loop_footer_branch
      %16 = sbr.rel target = $region3
    $region8: #{tpu_custom_call.1} parent=1 // loop_exit
      _
    %863 = vsyncpa [#allocation3], 1
    %s864 = scalar_lea.sflag [#allocation3], 1
    %865 = vsyncpa %s864, 1

</llo_original>
